<compile_context>
chip_gen: v5e
topology: v5e:2x2
jax: 0.10.0
libtpu: 0.0.40
codegen_flags: <defaults>
</compile_context>

<pallas_src>
import functools

import jax
import jax.numpy as jnp
import numpy as np
from jax.experimental import pallas as pl
from jax.experimental.pallas import tpu as pltpu


# ----------------------------- model hyperparams -----------------------------
DD = 8                                        # total feature dim of the layer input
MIN_GEN_NODES = 30
dd = DD // 2                                  # = 4, conditioning half
S_DIM = DD - dd - 1                           # = 3
HIDDEN = max(MIN_GEN_NODES, DD // 4)          # = 30
ST_OUT = 2 * (DD - dd) - 1                    # = 7  (s_dim + t_dim)


def _round_up(n, m):
    return ((n + m - 1) // m) * m


def _pick_tb(batch, tb_max):
    """Batch-tile (lane) size: multiple of 128, >=2 grid steps when possible."""
    tb_max = max(128, _round_up(int(tb_max), 128))
    half = _round_up(pl.cdiv(int(batch), 2), 128)   # >= 2 tiles for v7x megacore
    return max(128, min(tb_max, half))


# --------------------------------- kernel ------------------------------------
def _coupling_kernel(x_ref, w1_ref, b1_ref, w2_ref, b2_ref, w3_ref, b3_ref,
                     o_ref, *, dd, s_dim):
    """AffineCouplingLayer forward on one (DD, TB) batch tile (batch on lanes)."""
    nd = x_ref.shape[0]                              # = DD
    hp = jax.lax.Precision.HIGHEST                   # full-f32 MXU passes

    x1 = x_ref[:dd, :]                               # (dd, TB) conditioning half

    # --- st_layers: 3-layer MLP (ReLU, ReLU, Identity), W @ X form, f32 ------
    h = jnp.dot(w1_ref[...], x1,
                preferred_element_type=jnp.float32, precision=hp) + b1_ref[...]
    h = jnp.maximum(h, 0.0)                          # (HIDDEN, TB)
    h = jnp.dot(w2_ref[...], h,
                preferred_element_type=jnp.float32, precision=hp) + b2_ref[...]
    h = jnp.maximum(h, 0.0)                          # (HIDDEN, TB)
    st = jnp.dot(w3_ref[...], h,
                 preferred_element_type=jnp.float32, precision=hp) + b3_ref[...]
    # st: (2*s_dim + 1, TB) = [s_raw (s_dim rows) | t (s_dim + 1 rows)]

    # --- affine coupling (no sublane concats; per-column zero-sum s) ---------
    s = 0.1 * jnp.tanh(st[:s_dim, :])                # clamp_func, (s_dim, TB)
    s_last = -jnp.sum(s, axis=0, keepdims=True)      # sum_func, (1, TB)

    # output = cat([trans_x, x1]); written as three full-lane sub-slice stores.
    o_ref[:s_dim, :] = (x_ref[dd:dd + s_dim, :] * jnp.exp(s)
                        + st[s_dim:2 * s_dim, :])            # trans_x rows 0..s_dim-1
    o_ref[s_dim:nd - dd, :] = (x_ref[nd - 1:nd, :] * jnp.exp(s_last)
                               + st[2 * s_dim:, :])           # trans_x last row
    o_ref[nd - dd:, :] = x1                                   # pass-through half


# --------------------------------- wrappers -----------------------------------
def affine_coupling_forward_bol(x_t, params, *, tb=32768):
    """Batch-on-lanes entry: x_t is (DD, B) float32 -> (DD, B) float32.

    Preferred entry point: a chain of coupling layers can stay in this layout
    and never pay a transpose or a padded copy.
    """
    D, B = x_t.shape
    assert D == DD

    TB = _pick_tb(B, tb)
    n_tiles = pl.cdiv(B, TB)                         # ragged tail -> partial block

    # Pre-transpose weights to (out, in); biases -> (out, 1). All f32.
    w1t = jnp.asarray(params["w1"]).T.astype(jnp.float32)        # (HIDDEN, dd)
    w2t = jnp.asarray(params["w2"]).T.astype(jnp.float32)        # (HIDDEN, HIDDEN)
    w3t = jnp.asarray(params["w3"]).T.astype(jnp.float32)        # (ST_OUT, HIDDEN)
    b1 = jnp.asarray(params["b1"]).reshape(-1, 1).astype(jnp.float32)  # (HIDDEN, 1)
    b2 = jnp.asarray(params["b2"]).reshape(-1, 1).astype(jnp.float32)  # (HIDDEN, 1)
    b3 = jnp.asarray(params["b3"]).reshape(-1, 1).astype(jnp.float32)  # (ST_OUT, 1)

    kernel = functools.partial(_coupling_kernel, dd=dd, s_dim=S_DIM)
    const = lambda shape: pl.BlockSpec(shape, lambda i: (0, 0))  # VMEM-resident weights

    out_t = pl.pallas_call(
        kernel,
        out_shape=jax.ShapeDtypeStruct((DD, B), jnp.float32),
        grid_spec=pltpu.PrefetchScalarGridSpec(
            num_scalar_prefetch=0,
            grid=(n_tiles,),                          # batch tiles, auto double-buffered
            in_specs=[
                pl.BlockSpec((DD, TB), lambda i: (0, i)),
                const(w1t.shape), const(b1.shape),
                const(w2t.shape), const(b2.shape),
                const(w3t.shape), const(b3.shape),
            ],
            out_specs=pl.BlockSpec((DD, TB), lambda i: (0, i)),
        ),
        compiler_params=pltpu.CompilerParams(
            dimension_semantics=("parallel",),        # 2-TC sharding on v7x
            vmem_limit_bytes=48 * 1024 * 1024,        # > v5e's 16 MiB default; < v7x 64 MiB
        ),
    )(x_t, w1t, b1, w2t, b2, w3t, b3)
    return out_t


def affine_coupling_forward(x, params, *, tb=32768):
    """(B, DD) interface matching the torch module (one transpose each way).

    For chained layers prefer affine_coupling_forward_bol on (DD, B) directly.
    """
    return affine_coupling_forward_bol(x.T, params, tb=tb).T


# ------------------------------ reference (pure JAX, f32) ----------------------
def reference_forward(x, p):
    hp = jax.lax.Precision.HIGHEST
    x1, x2 = x[:, :dd], x[:, dd:]
    h = jax.nn.relu(jnp.dot(x1, p["w1"], precision=hp) + p["b1"])
    h = jax.nn.relu(jnp.dot(h, p["w2"], precision=hp) + p["b2"])
    st = jnp.dot(h, p["w3"], precision=hp) + p["b3"]
    s = 0.1 * jnp.tanh(st[:, :S_DIM])
    s = jnp.concatenate([s, -jnp.sum(s, axis=-1, keepdims=True)], axis=-1)
    t = st[:, S_DIM:]
    trans_x = x2 * jnp.exp(s) + t
    return jnp.concatenate([trans_x, x1], axis=-1)


# ---------------------------------- main ---------------------------------------
if __name__ == "__main__":
    key = jax.random.PRNGKey(0)
    k_x, k1, k2, k3, k4, k5, k6 = jax.random.split(key, 7)

    B = 256                                           # small; -> TB=128, 2 grid steps
    x = jax.random.normal(k_x, (B, DD), dtype=jnp.float32)

    # Deterministic parameter init (shapes follow the module's MLP in x @ W form).
    params = {
        "w1": 0.1 * jax.random.normal(k1, (dd, HIDDEN), dtype=jnp.float32),
        "b1": 0.1 * jax.random.normal(k2, (1, HIDDEN), dtype=jnp.float32),
        "w2": 0.1 * jax.random.normal(k3, (HIDDEN, HIDDEN), dtype=jnp.float32),
        "b2": 0.1 * jax.random.normal(k4, (1, HIDDEN), dtype=jnp.float32),
        "w3": 0.1 * jax.random.normal(k5, (HIDDEN, ST_OUT), dtype=jnp.float32),
        "b3": 0.1 * jax.random.normal(k6, (1, ST_OUT), dtype=jnp.float32),
    }

    ref = reference_forward(x, params)

    # (B, DD) torch-style interface.
    out = jax.block_until_ready(affine_coupling_forward(x, params))
    np.testing.assert_allclose(np.asarray(out), np.asarray(ref), rtol=2e-3, atol=2e-3)

    # Batch-on-lanes path (no transposes) — preferred when chaining layers.
    out_bol = jax.block_until_ready(affine_coupling_forward_bol(x.T, params))
    np.testing.assert_allclose(np.asarray(out_bol), np.asarray(ref.T),
                               rtol=2e-3, atol=2e-3)

    # Ragged tiny batch: exercises the clipped partial final block (no jnp.pad).
    out_small = jax.block_until_ready(affine_coupling_forward(x[:4], params))
    np.testing.assert_allclose(np.asarray(out_small), np.asarray(ref[:4]),
                               rtol=2e-3, atol=2e-3)

    # Module's assert (mean of s_output over features == 0) holds by construction:
    # the last row of s is the negated sum of the others.
    # TODO(synk): the torch runtime assert is not re-checked inside the kernel.
    print("KERNEL_OK")
</pallas_src>

<mosaic_0001>
module attributes {stable_mosaic.version = 11 : i64} {
  func.func @_coupling_kernel(%arg0: i32, %arg1: memref<8x128xf32, #tpu.memory_space<vmem>>, %arg2: memref<30x4xf32, #tpu.memory_space<vmem>>, %arg3: memref<30x1xf32, #tpu.memory_space<vmem>>, %arg4: memref<30x30xf32, #tpu.memory_space<vmem>>, %arg5: memref<30x1xf32, #tpu.memory_space<vmem>>, %arg6: memref<7x30xf32, #tpu.memory_space<vmem>>, %arg7: memref<7x1xf32, #tpu.memory_space<vmem>>, %arg8: memref<8x128xf32, #tpu.memory_space<vmem>>) attributes {dimension_semantics = [#tpu.dimension_semantics<parallel>], iteration_bounds = array<i64: 2>, scalar_prefetch = 0 : i64, scratch_operands = 0 : i64, tpu.core_type = #tpu.core_type<tc>, window_params = [{transform_indices = @transform_0, window_bounds = array<i64: 8, 128>}, {pipeline_mode = #tpu.pipeline_mode<synchronous>, transform_indices = @transform_1, window_bounds = array<i64: 30, 4>}, {pipeline_mode = #tpu.pipeline_mode<synchronous>, transform_indices = @transform_2, window_bounds = array<i64: 30, 1>}, {pipeline_mode = #tpu.pipeline_mode<synchronous>, transform_indices = @transform_3, window_bounds = array<i64: 30, 30>}, {pipeline_mode = #tpu.pipeline_mode<synchronous>, transform_indices = @transform_4, window_bounds = array<i64: 30, 1>}, {pipeline_mode = #tpu.pipeline_mode<synchronous>, transform_indices = @transform_5, window_bounds = array<i64: 7, 30>}, {pipeline_mode = #tpu.pipeline_mode<synchronous>, transform_indices = @transform_6, window_bounds = array<i64: 7, 1>}, {transform_indices = @transform_7, window_bounds = array<i64: 8, 128>}]} {
    %c0 = arith.constant 0 : index
    %c0_0 = arith.constant 0 : index
    %0 = vector.load %arg1[%c0, %c0_0] : memref<8x128xf32, #tpu.memory_space<vmem>>, vector<4x128xf32>
    %c0_1 = arith.constant 0 : index
    %c0_2 = arith.constant 0 : index
    %1 = vector.load %arg2[%c0_1, %c0_2] : memref<30x4xf32, #tpu.memory_space<vmem>>, vector<30x4xf32>
    %cst = arith.constant dense<0.000000e+00> : vector<30x128xf32>
    %2 = tpu.matmul %1, %0, %cst {dimension_numbers = #tpu.dot_dimension_numbers<[1], [0], [0], [1], [0, 0, 1, 1], [], []>, precision = #tpu.contract_precision<fp32>} : vector<30x4xf32>, vector<4x128xf32>, vector<30x128xf32> -> vector<30x128xf32>
    %c0_3 = arith.constant 0 : index
    %c0_4 = arith.constant 0 : index
    %3 = vector.load %arg3[%c0_3, %c0_4] : memref<30x1xf32, #tpu.memory_space<vmem>>, vector<30x1xf32>
    %4 = vector.broadcast %3 : vector<30x1xf32> to vector<30x128xf32>
    %5 = arith.addf %2, %4 : vector<30x128xf32>
    %cst_5 = arith.constant 0.000000e+00 : f32
    %6 = vector.broadcast %cst_5 : f32 to vector<30x128xf32>
    %7 = arith.maximumf %5, %6 : vector<30x128xf32>
    %c0_6 = arith.constant 0 : index
    %c0_7 = arith.constant 0 : index
    %8 = vector.load %arg4[%c0_6, %c0_7] : memref<30x30xf32, #tpu.memory_space<vmem>>, vector<30x30xf32>
    %cst_8 = arith.constant dense<0.000000e+00> : vector<30x128xf32>
    %9 = tpu.matmul %8, %7, %cst_8 {dimension_numbers = #tpu.dot_dimension_numbers<[1], [0], [0], [1], [0, 0, 1, 1], [], []>, precision = #tpu.contract_precision<fp32>} : vector<30x30xf32>, vector<30x128xf32>, vector<30x128xf32> -> vector<30x128xf32>
    %c0_9 = arith.constant 0 : index
    %c0_10 = arith.constant 0 : index
    %10 = vector.load %arg5[%c0_9, %c0_10] : memref<30x1xf32, #tpu.memory_space<vmem>>, vector<30x1xf32>
    %11 = vector.broadcast %10 : vector<30x1xf32> to vector<30x128xf32>
    %12 = arith.addf %9, %11 : vector<30x128xf32>
    %cst_11 = arith.constant 0.000000e+00 : f32
    %13 = vector.broadcast %cst_11 : f32 to vector<30x128xf32>
    %14 = arith.maximumf %12, %13 : vector<30x128xf32>
    %c0_12 = arith.constant 0 : index
    %c0_13 = arith.constant 0 : index
    %15 = vector.load %arg6[%c0_12, %c0_13] : memref<7x30xf32, #tpu.memory_space<vmem>>, vector<7x30xf32>
    %cst_14 = arith.constant dense<0.000000e+00> : vector<7x128xf32>
    %16 = tpu.matmul %15, %14, %cst_14 {dimension_numbers = #tpu.dot_dimension_numbers<[1], [0], [0], [1], [0, 0, 1, 1], [], []>, precision = #tpu.contract_precision<fp32>} : vector<7x30xf32>, vector<30x128xf32>, vector<7x128xf32> -> vector<7x128xf32>
    %c0_15 = arith.constant 0 : index
    %c0_16 = arith.constant 0 : index
    %17 = vector.load %arg7[%c0_15, %c0_16] : memref<7x1xf32, #tpu.memory_space<vmem>>, vector<7x1xf32>
    %18 = vector.broadcast %17 : vector<7x1xf32> to vector<7x128xf32>
    %19 = arith.addf %16, %18 : vector<7x128xf32>
    %20 = vector.extract_strided_slice %19 {offsets = [0, 0], sizes = [3, 128], strides = [1, 1]} : vector<7x128xf32> to vector<3x128xf32>
    %21 = math.tanh %20 : vector<3x128xf32>
    %cst_17 = arith.constant 1.000000e-01 : f32
    %22 = vector.broadcast %cst_17 : f32 to vector<3x128xf32>
    %23 = arith.mulf %22, %21 : vector<3x128xf32>
    %cst_18 = arith.constant dense<0.000000e+00> : vector<128xf32>
    %24 = vector.multi_reduction <add>, %23, %cst_18 [0] : vector<3x128xf32> to vector<128xf32>
    %25 = vector.shape_cast %24 : vector<128xf32> to vector<1x128xf32>
    %cst_19 = arith.constant 0.000000e+00 : f32
    %26 = vector.broadcast %cst_19 : f32 to vector<1x128xf32>
    %27 = arith.subf %26, %25 : vector<1x128xf32>
    %c4 = arith.constant 4 : index
    %c0_20 = arith.constant 0 : index
    %28 = vector.load %arg1[%c4, %c0_20] : memref<8x128xf32, #tpu.memory_space<vmem>>, vector<3x128xf32>
    %29 = math.exp %23 : vector<3x128xf32>
    %30 = arith.mulf %28, %29 : vector<3x128xf32>
    %31 = vector.extract_strided_slice %19 {offsets = [3, 0], sizes = [3, 128], strides = [1, 1]} : vector<7x128xf32> to vector<3x128xf32>
    %32 = arith.addf %30, %31 : vector<3x128xf32>
    %c0_21 = arith.constant 0 : index
    %c0_22 = arith.constant 0 : index
    %33 = vector.load %arg8[%c0_21, %c0_22] : memref<8x128xf32, #tpu.memory_space<vmem>>, vector<3x128xf32>
    tpu.vector_store %arg8[%c0_21, %c0_22], %32 {strides = array<i32>} : memref<8x128xf32, #tpu.memory_space<vmem>>, vector<3x128xf32>,
    %c7 = arith.constant 7 : index
    %c0_23 = arith.constant 0 : index
    %34 = vector.load %arg1[%c7, %c0_23] : memref<8x128xf32, #tpu.memory_space<vmem>>, vector<1x128xf32>
    %35 = math.exp %27 : vector<1x128xf32>
    %36 = arith.mulf %34, %35 : vector<1x128xf32>
    %37 = vector.extract_strided_slice %19 {offsets = [6, 0], sizes = [1, 128], strides = [1, 1]} : vector<7x128xf32> to vector<1x128xf32>
    %38 = arith.addf %36, %37 : vector<1x128xf32>
    %c3 = arith.constant 3 : index
    %c0_24 = arith.constant 0 : index
    %39 = vector.load %arg8[%c3, %c0_24] : memref<8x128xf32, #tpu.memory_space<vmem>>, vector<1x128xf32>
    tpu.vector_store %arg8[%c3, %c0_24], %38 {strides = array<i32>} : memref<8x128xf32, #tpu.memory_space<vmem>>, vector<1x128xf32>,
    %c4_25 = arith.constant 4 : index
    %c0_26 = arith.constant 0 : index
    %40 = vector.load %arg8[%c4_25, %c0_26] : memref<8x128xf32, #tpu.memory_space<vmem>>, vector<4x128xf32>
    tpu.vector_store %arg8[%c4_25, %c0_26], %0 {strides = array<i32>} : memref<8x128xf32, #tpu.memory_space<vmem>>, vector<4x128xf32>,
    return
  }
  func.func @transform_0(%arg0: i32) -> (i32, i32) {
    %c0_i32 = arith.constant 0 : i32
    %c0_i32_0 = arith.constant 0 : i32
    return %c0_i32, %arg0 : i32, i32
  }
  func.func @transform_1(%arg0: i32) -> (i32, i32) {
    %c0_i32 = arith.constant 0 : i32
    %c0_i32_0 = arith.constant 0 : i32
    %c0_i32_1 = arith.constant 0 : i32
    return %c0_i32, %c0_i32_0 : i32, i32
  }
  func.func @transform_2(%arg0: i32) -> (i32, i32) {
    %c0_i32 = arith.constant 0 : i32
    %c0_i32_0 = arith.constant 0 : i32
    %c0_i32_1 = arith.constant 0 : i32
    return %c0_i32, %c0_i32_0 : i32, i32
  }
  func.func @transform_3(%arg0: i32) -> (i32, i32) {
    %c0_i32 = arith.constant 0 : i32
    %c0_i32_0 = arith.constant 0 : i32
    %c0_i32_1 = arith.constant 0 : i32
    return %c0_i32, %c0_i32_0 : i32, i32
  }
  func.func @transform_4(%arg0: i32) -> (i32, i32) {
    %c0_i32 = arith.constant 0 : i32
    %c0_i32_0 = arith.constant 0 : i32
    %c0_i32_1 = arith.constant 0 : i32
    return %c0_i32, %c0_i32_0 : i32, i32
  }
  func.func @transform_5(%arg0: i32) -> (i32, i32) {
    %c0_i32 = arith.constant 0 : i32
    %c0_i32_0 = arith.constant 0 : i32
    %c0_i32_1 = arith.constant 0 : i32
    return %c0_i32, %c0_i32_0 : i32, i32
  }
  func.func @transform_6(%arg0: i32) -> (i32, i32) {
    %c0_i32 = arith.constant 0 : i32
    %c0_i32_0 = arith.constant 0 : i32
    %c0_i32_1 = arith.constant 0 : i32
    return %c0_i32, %c0_i32_0 : i32, i32
  }
  func.func @transform_7(%arg0: i32) -> (i32, i32) {
    %c0_i32 = arith.constant 0 : i32
    %c0_i32_0 = arith.constant 0 : i32
    return %c0_i32, %arg0 : i32, i32
  }
}

</mosaic_0001>

<llo_original>
// kernel: tpu_custom_call.1
$region0: #{tpu_custom_call.1}
  #allocation0 [shape = 'u32[]', space=smem, size = 0x4, offset = 0x4, fixed_abs, tag = 'smem constant byte address 0x4 - core index']
  #allocation1 [shape = 'u32[72,128]{1,0:T(1,128)}', space=vmem, size = 0x9000, scoped, tag = 'internal scratch']
  %s0 = inlined_call_operand.vmem [shape: f32[8,256], index: 0, kind: input, shape index: {}]
  %s1 = inlined_call_operand.vmem [shape: f32[30,4], index: 1, kind: input, shape index: {}]
  %s2 = inlined_call_operand.vmem [shape: f32[30,1], index: 2, kind: input, shape index: {}]
  %s3 = inlined_call_operand.vmem [shape: f32[30,30], index: 3, kind: input, shape index: {}]
  %s4 = inlined_call_operand.vmem [shape: f32[30,1], index: 4, kind: input, shape index: {}]
  %s5 = inlined_call_operand.vmem [shape: f32[7,30], index: 5, kind: input, shape index: {}]
  %s6 = inlined_call_operand.vmem [shape: f32[7,1], index: 6, kind: input, shape index: {}]
  %s7 = inlined_call_operand.hbm [shape: f32[8,256], index: 7, kind: output, shape index: {}]
  %s8 = sld [smem:[#allocation0]]
  $region61: #{tpu_custom_call.1} parent=0
    _
  %s10 = ssub.s32 1, %s8
  %s11 = scalar_select 0, %s10, %s8
  $region1: #{tpu_custom_call.1} parent=0
    #allocation2 [shape = 'u8[8192]{0}', space=vmem, size = 0x2000, scoped, tag = 'output window, operand 0']
    #allocation3 [shape = 's32[2]{0}', space=sflag, size = 0x8, scoped, tag = 'scoped memory for tpu_custom_call.1']
    %12 = vsyncpa [#allocation3], 0
    %s13 = scalar_lea.sflag [#allocation3], 1
    %14 = vsyncpa %s13, 0
    loop: start=0, step=1, limit=4
    $region2: #{tpu_custom_call.1} parent=1 // loop_pre_header
      _
    $region3: #{tpu_custom_call.1} parent=1 // loop_header
      %s16 = sphi 0, %s20
      %p17 = scmp.ge.s32.totalorder %s16, 4
      %s26 = sphi 0, %s28
      %s29 = sphi 0, %s26
      %s30 = sphi 0, %s29
      %s46 = sphi 0, %s30
      %s50 = sphi 0, %s50
      %s52 = sphi 0, %s50
      %s53 = sphi 0, %s52
      %s67 = sphi 0, %s53
      %s71 = sphi 0, %s71
      %s73 = sphi 0, %s71
      %s74 = sphi 0, %s73
      %s88 = sphi 0, %s74
      %s92 = sphi 0, %s92
      %s94 = sphi 0, %s92
      %s95 = sphi 0, %s94
      %s109 = sphi 0, %s95
      %s113 = sphi 0, %s113
      %s115 = sphi 0, %s113
      %s116 = sphi 0, %s115
      %s130 = sphi 0, %s116
      %s134 = sphi 0, %s134
      %s136 = sphi 0, %s134
      %s137 = sphi 0, %s136
      %s151 = sphi 0, %s137
      %s155 = sphi 0, %s155
      %s157 = sphi 0, %s155
      %s158 = sphi 0, %s157
      %s172 = sphi 0, %s158
      %s178 = sphi 0, %s180
      %s181 = sphi 0, %s178
      %s182 = sphi 0, %s181
      %s198 = sphi 0, %s182
    $region4: #{tpu_custom_call.1} parent=1 // loop_header_branch
      %19 = sbr.rel (%p17) target = $region8
    $region5: #{tpu_custom_call.1} parent=1 // loop_body
      %s21 = ssub.s32 %s16, 1
      %s22 = ssub.s32 %s16, 2
      %s23 = sadd.s32 %s16, 1
      %s24 = ssub.s32 %s16, %s23
      %p25 = scmp.eq.s32.totalorder %s24, 0
      %s27 = sadd.s32 %s26, 1
      %s28 = scalar_select %p25, %s26, %s27
      %p31 = pneg %p25
      %p32 = scmp.eq.s32.totalorder %s16, 1
      %p33 = por %p31, %p32
      %p34 = scmp.ne.s32.totalorder %s26, %s29
      %p35 = scmp.eq.s32.totalorder %s16, 0
      %p36 = por %p34, %p35
      %p37 = scmp.ne.s32.totalorder %s26, %s29
      %p38 = scmp.eq.s32.totalorder %s21, 1
      %p39 = por %p37, %p38
      %p40 = scmp.ne.s32.totalorder %s29, %s30
      %p41 = scmp.eq.s32.totalorder %s21, 0
      %p42 = por %p40, %p41
      %p43 = scmp.ne.s32.totalorder %s29, %s30
      %p44 = scmp.eq.s32.totalorder %s22, 1
      %p45 = por %p43, %p44
      %p47 = scmp.ne.s32.totalorder %s30, %s46
      %p48 = scmp.eq.s32.totalorder %s22, 0
      %p49 = por %p47, %p48
      %s51 = sadd.s32 %s50, 1
      %p54 = scmp.eq.s32.totalorder %s16, 1
      %p55 = scmp.ne.s32.totalorder %s50, %s52
      %p56 = scmp.eq.s32.totalorder %s16, 0
      %p57 = por %p55, %p56
      %p58 = scmp.ne.s32.totalorder %s50, %s52
      %p59 = scmp.eq.s32.totalorder %s21, 1
      %p60 = por %p58, %p59
      %p61 = scmp.ne.s32.totalorder %s52, %s53
      %p62 = scmp.eq.s32.totalorder %s21, 0
      %p63 = por %p61, %p62
      %p64 = scmp.ne.s32.totalorder %s52, %s53
      %p65 = scmp.eq.s32.totalorder %s22, 1
      %p66 = por %p64, %p65
      %p68 = scmp.ne.s32.totalorder %s53, %s67
      %p69 = scmp.eq.s32.totalorder %s22, 0
      %p70 = por %p68, %p69
      %s72 = sadd.s32 %s71, 1
      %p75 = scmp.eq.s32.totalorder %s16, 1
      %p76 = scmp.ne.s32.totalorder %s71, %s73
      %p77 = scmp.eq.s32.totalorder %s16, 0
      %p78 = por %p76, %p77
      %p79 = scmp.ne.s32.totalorder %s71, %s73
      %p80 = scmp.eq.s32.totalorder %s21, 1
      %p81 = por %p79, %p80
      %p82 = scmp.ne.s32.totalorder %s73, %s74
      %p83 = scmp.eq.s32.totalorder %s21, 0
      %p84 = por %p82, %p83
      %p85 = scmp.ne.s32.totalorder %s73, %s74
      %p86 = scmp.eq.s32.totalorder %s22, 1
      %p87 = por %p85, %p86
      %p89 = scmp.ne.s32.totalorder %s74, %s88
      %p90 = scmp.eq.s32.totalorder %s22, 0
      %p91 = por %p89, %p90
      %s93 = sadd.s32 %s92, 1
      %p96 = scmp.eq.s32.totalorder %s16, 1
      %p97 = scmp.ne.s32.totalorder %s92, %s94
      %p98 = scmp.eq.s32.totalorder %s16, 0
      %p99 = por %p97, %p98
      %p100 = scmp.ne.s32.totalorder %s92, %s94
      %p101 = scmp.eq.s32.totalorder %s21, 1
      %p102 = por %p100, %p101
      %p103 = scmp.ne.s32.totalorder %s94, %s95
      %p104 = scmp.eq.s32.totalorder %s21, 0
      %p105 = por %p103, %p104
      %p106 = scmp.ne.s32.totalorder %s94, %s95
      %p107 = scmp.eq.s32.totalorder %s22, 1
      %p108 = por %p106, %p107
      %p110 = scmp.ne.s32.totalorder %s95, %s109
      %p111 = scmp.eq.s32.totalorder %s22, 0
      %p112 = por %p110, %p111
      %s114 = sadd.s32 %s113, 1
      %p117 = scmp.eq.s32.totalorder %s16, 1
      %p118 = scmp.ne.s32.totalorder %s113, %s115
      %p119 = scmp.eq.s32.totalorder %s16, 0
      %p120 = por %p118, %p119
      %p121 = scmp.ne.s32.totalorder %s113, %s115
      %p122 = scmp.eq.s32.totalorder %s21, 1
      %p123 = por %p121, %p122
      %p124 = scmp.ne.s32.totalorder %s115, %s116
      %p125 = scmp.eq.s32.totalorder %s21, 0
      %p126 = por %p124, %p125
      %p127 = scmp.ne.s32.totalorder %s115, %s116
      %p128 = scmp.eq.s32.totalorder %s22, 1
      %p129 = por %p127, %p128
      %p131 = scmp.ne.s32.totalorder %s116, %s130
      %p132 = scmp.eq.s32.totalorder %s22, 0
      %p133 = por %p131, %p132
      %s135 = sadd.s32 %s134, 1
      %p138 = scmp.eq.s32.totalorder %s16, 1
      %p139 = scmp.ne.s32.totalorder %s134, %s136
      %p140 = scmp.eq.s32.totalorder %s16, 0
      %p141 = por %p139, %p140
      %p142 = scmp.ne.s32.totalorder %s134, %s136
      %p143 = scmp.eq.s32.totalorder %s21, 1
      %p144 = por %p142, %p143
      %p145 = scmp.ne.s32.totalorder %s136, %s137
      %p146 = scmp.eq.s32.totalorder %s21, 0
      %p147 = por %p145, %p146
      %p148 = scmp.ne.s32.totalorder %s136, %s137
      %p149 = scmp.eq.s32.totalorder %s22, 1
      %p150 = por %p148, %p149
      %p152 = scmp.ne.s32.totalorder %s137, %s151
      %p153 = scmp.eq.s32.totalorder %s22, 0
      %p154 = por %p152, %p153
      %s156 = sadd.s32 %s155, 1
      %p159 = scmp.eq.s32.totalorder %s16, 1
      %p160 = scmp.ne.s32.totalorder %s155, %s157
      %p161 = scmp.eq.s32.totalorder %s16, 0
      %p162 = por %p160, %p161
      %p163 = scmp.ne.s32.totalorder %s155, %s157
      %p164 = scmp.eq.s32.totalorder %s21, 1
      %p165 = por %p163, %p164
      %p166 = scmp.ne.s32.totalorder %s157, %s158
      %p167 = scmp.eq.s32.totalorder %s21, 0
      %p168 = por %p166, %p167
      %p169 = scmp.ne.s32.totalorder %s157, %s158
      %p170 = scmp.eq.s32.totalorder %s22, 1
      %p171 = por %p169, %p170
      %p173 = scmp.ne.s32.totalorder %s158, %s172
      %p174 = scmp.eq.s32.totalorder %s22, 0
      %p175 = por %p173, %p174
      %s176 = ssub.s32 %s16, %s23
      %p177 = scmp.eq.s32.totalorder %s176, 0
      %s179 = sadd.s32 %s178, 1
      %s180 = scalar_select %p177, %s178, %s179
      %p183 = pneg %p177
      %p184 = scmp.eq.s32.totalorder %s16, 1
      %p185 = por %p183, %p184
      %p186 = scmp.ne.s32.totalorder %s178, %s181
      %p187 = scmp.eq.s32.totalorder %s16, 0
      %p188 = por %p186, %p187
      %p189 = scmp.ne.s32.totalorder %s178, %s181
      %p190 = scmp.eq.s32.totalorder %s21, 1
      %p191 = por %p189, %p190
      %p192 = scmp.ne.s32.totalorder %s181, %s182
      %p193 = scmp.eq.s32.totalorder %s21, 0
      %p194 = por %p192, %p193
      %p195 = scmp.ne.s32.totalorder %s181, %s182
      %p196 = scmp.eq.s32.totalorder %s22, 1
      %p197 = por %p195, %p196
      %p199 = scmp.ne.s32.totalorder %s182, %s198
      %p200 = scmp.eq.s32.totalorder %s22, 0
      %p201 = por %p199, %p200
      %p202 = scmp.le.s32.totalorder 1, %s16
      %p203 = scmp.lt.s32.totalorder %s16, 3
      %p204 = pnand %p202, %p203
      %p205 = pneg %p204
      // Predicated region
      $region9: #{tpu_custom_call.1} parent=5 // pred_check
        _
      $region10: #{tpu_custom_call.1} parent=5 // pred_check_branch
        %207 = sbr.rel (%p204) target = $region12
      $region11: #{tpu_custom_call.1} parent=5 // pred_region
        %s208 = ssub.s32 %s16, 1
        // Predicated region
        $region13: #{tpu_custom_call.1} parent=11 // pred_check
          %p209 = pneg %p63
        $region14: #{tpu_custom_call.1} parent=11 // pred_check_branch
          %211 = sbr.rel (%p209) target = $region16
        $region15: #{tpu_custom_call.1} parent=11 // pred_region
          _
        $region16: #{tpu_custom_call.1} parent=11 // pred_fallthru
          _
        // Predicated region
        $region17: #{tpu_custom_call.1} parent=11 // pred_check
          %p212 = pneg %p84
        $region18: #{tpu_custom_call.1} parent=11 // pred_check_branch
          %214 = sbr.rel (%p212) target = $region20
        $region19: #{tpu_custom_call.1} parent=11 // pred_region
          _
        $region20: #{tpu_custom_call.1} parent=11 // pred_fallthru
          _
        // Predicated region
        $region21: #{tpu_custom_call.1} parent=11 // pred_check
          %p215 = pneg %p105
        $region22: #{tpu_custom_call.1} parent=11 // pred_check_branch
          %217 = sbr.rel (%p215) target = $region24
        $region23: #{tpu_custom_call.1} parent=11 // pred_region
          _
        $region24: #{tpu_custom_call.1} parent=11 // pred_fallthru
          _
        // Predicated region
        $region25: #{tpu_custom_call.1} parent=11 // pred_check
          %p218 = pneg %p126
        $region26: #{tpu_custom_call.1} parent=11 // pred_check_branch
          %220 = sbr.rel (%p218) target = $region28
        $region27: #{tpu_custom_call.1} parent=11 // pred_region
          _
        $region28: #{tpu_custom_call.1} parent=11 // pred_fallthru
          _
        // Predicated region
        $region29: #{tpu_custom_call.1} parent=11 // pred_check
          %p221 = pneg %p147
        $region30: #{tpu_custom_call.1} parent=11 // pred_check_branch
          %223 = sbr.rel (%p221) target = $region32
        $region31: #{tpu_custom_call.1} parent=11 // pred_region
          _
        $region32: #{tpu_custom_call.1} parent=11 // pred_fallthru
          _
        // Predicated region
        $region33: #{tpu_custom_call.1} parent=11 // pred_check
          %p224 = pneg %p168
        $region34: #{tpu_custom_call.1} parent=11 // pred_check_branch
          %226 = sbr.rel (%p224) target = $region36
        $region35: #{tpu_custom_call.1} parent=11 // pred_region
          _
        $region36: #{tpu_custom_call.1} parent=11 // pred_fallthru
          _
      $region12: #{tpu_custom_call.1} parent=5 // pred_fallthru
        _
      %p227 = scmp.lt.s32.totalorder %s16, 2
      // Predicated region
      $region37: #{tpu_custom_call.1} parent=5 // pred_check
        %p228 = pneg %p227
      $region38: #{tpu_custom_call.1} parent=5 // pred_check_branch
        %230 = sbr.rel (%p228) target = $region40
      $region39: #{tpu_custom_call.1} parent=5 // pred_region
        // Predicated region
        $region41: #{tpu_custom_call.1} parent=39 // pred_check
          %p231 = pneg %p36
        $region42: #{tpu_custom_call.1} parent=39 // pred_check_branch
          %233 = sbr.rel (%p231) target = $region44
        $region43: #{tpu_custom_call.1} parent=39 // pred_region
          %p234 = scmp.lt.s32.totalorder %s16, 1
          %s235 = scalar_select %p234, %s16, 1
          %s236 = smul.addr %s235, 8
          %s237 = scalar_lea.vmem %s0, %s236
        $region44: #{tpu_custom_call.1} parent=39 // pred_fallthru
          _
      $region40: #{tpu_custom_call.1} parent=5 // pred_fallthru
        _
      %p238 = scmp.le.s32.totalorder 1, %s16
      %p239 = scmp.lt.s32.totalorder %s16, 3
      %p240 = pnand %p238, %p239
      %p241 = pneg %p240
      // Predicated region
      $region45: #{tpu_custom_call.1} parent=5 // pred_check
        _
      $region46: #{tpu_custom_call.1} parent=5 // pred_check_branch
        %243 = sbr.rel (%p240) target = $region48
      $region47: #{tpu_custom_call.1} parent=5 // pred_region
        %s244 = ssub.s32 %s16, 1
        %p245 = scmp.lt.s32.totalorder %s21, 1
        %s246 = scalar_select %p245, %s21, 1
        %s247 = smul.addr %s246, 8
        %s248 = scalar_lea.vmem %s0, %s247
        %p249 = pneg %p42
        %p250 = pneg %p39
        %p251 = pneg %p63
        %p252 = pneg %p60
        %p253 = pneg %p84
        %p254 = pneg %p81
        %p255 = pneg %p105
        %p256 = pneg %p102
        %p257 = pneg %p126
        %p258 = pneg %p123
        %p259 = pneg %p147
        %p260 = pneg %p144
        %p261 = pneg %p168
        %p262 = pneg %p165
        %p263 = pneg %p194
        %p264 = pneg %p191
        %s265 = sand.u32 %s181, 1
        %s266 = scalar_lea.sflag [#allocation3], %s265
        %s267 = sand.u32 %s181, 1
        %s268 = smul.addr %s267, 8
        %s269 = scalar_lea.vmem [#allocation2], %s268
        %p270 = scmp.lt.s32.totalorder %s21, 1
        %s271 = scalar_select %p270, %s21, 1
        %s272 = smul.addr %s271, 8
        %s273 = scalar_lea.vmem %s0, %s272
        %v274 = vld [vmem:[%s273] sm:$0xf]
        %v275 = vld [vmem:[%s1] sm:$0xff]
        %v276 = vld [vmem:[%s1 + $0x8] sm:$0xff]
        %v277 = vld [vmem:[%s1 + $0x10] sm:$0xff]
        %v278 = vld [vmem:[%s1 + $0x18] sm:$0x3f]
        %v279 = vld [vmem:[%s2] sm:$0xff]
        %v280 = vld [vmem:[%s2 + $0x8] sm:$0xff]
        %v281 = vld [vmem:[%s2 + $0x10] sm:$0xff]
        %v282 = vld [vmem:[%s2 + $0x18] sm:$0x3f]
        %284 = vset.pattern.permute.xlu0 0
        %285 = vperm.xlu0 %284, %v279
        %v286 = vpop.permute.xlu0 %285
        %289 = vset.pattern.permute.xlu0 0
        %290 = vperm.xlu0 %289, %v280
        %v291 = vpop.permute.xlu0 %290
        %294 = vset.pattern.permute.xlu0 0
        %295 = vperm.xlu0 %294, %v281
        %v296 = vpop.permute.xlu0 %295
        %299 = vset.pattern.permute.xlu0 0
        %300 = vperm.xlu0 %299, %v282
        %v301 = vpop.permute.xlu0 %300
        %vm303 = vcmask 31744
        %v305 = vsel %vm303, %v275, 0
        %v308 = vsel %vm303, %v276, 0
        %v311 = vsel %vm303, %v277, 0
        %v314 = vsel %vm303, %v278, 0
        %vm316 = vcmask 1043456
        %v318 = vsel %vm316, %v274, 0
        %320 = vmatpush.msra.mxu0 0.0
        %321 = vmatpush.msra.mxu0 0.0
        %322 = vmatpush.msra.mxu0 0.0
        %323 = vmatpush.msra.mxu0 0.0
        %324 = vmatpush.msra.mxu0 0.0
        %325 = vmatpush.msra.mxu0 0.0
        %326 = vmatpush.msra.mxu0 0.0
        %327 = vmatpush.msra.mxu0 0.0
        %328 = vmatpush.msra.mxu0 0.0
        %329 = vmatpush.msra.mxu0 0.0
        %330 = vmatpush.msra.mxu0 0.0
        %331 = vmatpush.msra.mxu0 0.0
        %332 = vmatpush.msra.mxu0 0.0
        %333 = vmatpush.msra.mxu0 0.0
        %334 = vmatpush.msra.mxu0 0.0
        %v335 = vand.u32 %v318, 4294901760
        %336 = vmatpush.msra.mxu0 %v335
        %v337 = vand.u32 %v305, 4294901760
        %v338 = vsub.f32 %v305, %v337
        %v339 = vand.u32 %v338, 4294901760
        %v340 = vsub.f32 %v338, %v339
        %v341 = vand.u32 %v340, 4294901760
        %342 = vmatmul.f32.gmra.mxu0 %v341
        %v343 = vpop.f32.mrf.mxu0
        %v344 = vadd.f32 %v286, %v343
        %v345 = vand.u32 %v308, 4294901760
        %v346 = vsub.f32 %v308, %v345
        %v347 = vand.u32 %v346, 4294901760
        %v348 = vsub.f32 %v346, %v347
        %v349 = vand.u32 %v348, 4294901760
        %350 = vmatmul.f32.gmra.mxu0 %v349
        %v351 = vpop.f32.mrf.mxu0
        %v352 = vadd.f32 %v291, %v351
        %v353 = vand.u32 %v311, 4294901760
        %v354 = vsub.f32 %v311, %v353
        %v355 = vand.u32 %v354, 4294901760
        %v356 = vsub.f32 %v354, %v355
        %v357 = vand.u32 %v356, 4294901760
        %358 = vmatmul.f32.gmra.mxu0 %v357
        %v359 = vpop.f32.mrf.mxu0
        %v360 = vadd.f32 %v296, %v359
        %v361 = vand.u32 %v314, 4294901760
        %v362 = vsub.f32 %v314, %v361
        %v363 = vand.u32 %v362, 4294901760
        %v364 = vsub.f32 %v362, %v363
        %v365 = vand.u32 %v364, 4294901760
        %366 = vmatmul.f32.gmra.mxu0 %v365
        %v367 = vpop.f32.mrf.mxu0
        %v368 = vadd.f32 %v301, %v367
        %369 = vdwg.mxu0
        %370 = vmatpush.msra.mxu0 0.0
        %371 = vmatpush.msra.mxu0 0.0
        %372 = vmatpush.msra.mxu0 0.0
        %373 = vmatpush.msra.mxu0 0.0
        %374 = vmatpush.msra.mxu0 0.0
        %375 = vmatpush.msra.mxu0 0.0
        %376 = vmatpush.msra.mxu0 0.0
        %377 = vmatpush.msra.mxu0 0.0
        %378 = vmatpush.msra.mxu0 0.0
        %379 = vmatpush.msra.mxu0 0.0
        %380 = vmatpush.msra.mxu0 0.0
        %381 = vmatpush.msra.mxu0 0.0
        %382 = vmatpush.msra.mxu0 0.0
        %383 = vmatpush.msra.mxu0 0.0
        %384 = vmatpush.msra.mxu0 0.0
        %v385 = vand.u32 %v318, 4294901760
        %v386 = vsub.f32 %v318, %v385
        %v387 = vand.u32 %v386, 4294901760
        %v388 = vsub.f32 %v386, %v387
        %v389 = vand.u32 %v388, 4294901760
        %390 = vmatpush.msra.mxu0 %v389
        %v391 = vand.u32 %v305, 4294901760
        %392 = vmatmul.f32.gmra.mxu0 %v391
        %v393 = vpop.f32.mrf.mxu0
        %v394 = vadd.f32 %v344, %v393
        %v395 = vand.u32 %v308, 4294901760
        %396 = vmatmul.f32.gmra.mxu0 %v395
        %v397 = vpop.f32.mrf.mxu0
        %v398 = vadd.f32 %v352, %v397
        %v399 = vand.u32 %v311, 4294901760
        %400 = vmatmul.f32.gmra.mxu0 %v399
        %v401 = vpop.f32.mrf.mxu0
        %v402 = vadd.f32 %v360, %v401
        %v403 = vand.u32 %v314, 4294901760
        %404 = vmatmul.f32.gmra.mxu0 %v403
        %v405 = vpop.f32.mrf.mxu0
        %v406 = vadd.f32 %v368, %v405
        %407 = vdwg.mxu0
        %408 = vmatpush.msra.mxu0 0.0
        %409 = vmatpush.msra.mxu0 0.0
        %410 = vmatpush.msra.mxu0 0.0
        %411 = vmatpush.msra.mxu0 0.0
        %412 = vmatpush.msra.mxu0 0.0
        %413 = vmatpush.msra.mxu0 0.0
        %414 = vmatpush.msra.mxu0 0.0
        %415 = vmatpush.msra.mxu0 0.0
        %416 = vmatpush.msra.mxu0 0.0
        %417 = vmatpush.msra.mxu0 0.0
        %418 = vmatpush.msra.mxu0 0.0
        %419 = vmatpush.msra.mxu0 0.0
        %420 = vmatpush.msra.mxu0 0.0
        %421 = vmatpush.msra.mxu0 0.0
        %422 = vmatpush.msra.mxu0 0.0
        %v423 = vand.u32 %v318, 4294901760
        %v424 = vsub.f32 %v318, %v423
        %425 = vmatpush.msra.mxu0 %v424
        %v426 = vand.u32 %v305, 4294901760
        %v427 = vsub.f32 %v305, %v426
        %428 = vmatmul.f32.gmra.mxu0 %v427
        %v429 = vpop.f32.mrf.mxu0
        %v430 = vadd.f32 %v394, %v429
        %v431 = vand.u32 %v308, 4294901760
        %v432 = vsub.f32 %v308, %v431
        %433 = vmatmul.f32.gmra.mxu0 %v432
        %v434 = vpop.f32.mrf.mxu0
        %v435 = vadd.f32 %v398, %v434
        %v436 = vand.u32 %v311, 4294901760
        %v437 = vsub.f32 %v311, %v436
        %438 = vmatmul.f32.gmra.mxu0 %v437
        %v439 = vpop.f32.mrf.mxu0
        %v440 = vadd.f32 %v402, %v439
        %v441 = vand.u32 %v314, 4294901760
        %v442 = vsub.f32 %v314, %v441
        %443 = vmatmul.f32.gmra.mxu0 %v442
        %v444 = vpop.f32.mrf.mxu0
        %v445 = vadd.f32 %v406, %v444
        %446 = vdwg.mxu0
        %447 = vmatpush.msra.mxu0 0.0
        %448 = vmatpush.msra.mxu0 0.0
        %449 = vmatpush.msra.mxu0 0.0
        %450 = vmatpush.msra.mxu0 0.0
        %451 = vmatpush.msra.mxu0 0.0
        %452 = vmatpush.msra.mxu0 0.0
        %453 = vmatpush.msra.mxu0 0.0
        %454 = vmatpush.msra.mxu0 0.0
        %455 = vmatpush.msra.mxu0 0.0
        %456 = vmatpush.msra.mxu0 0.0
        %457 = vmatpush.msra.mxu0 0.0
        %458 = vmatpush.msra.mxu0 0.0
        %459 = vmatpush.msra.mxu0 0.0
        %460 = vmatpush.msra.mxu0 0.0
        %461 = vmatpush.msra.mxu0 0.0
        %v462 = vand.u32 %v318, 4294901760
        %463 = vmatpush.msra.mxu0 %v462
        %v464 = vand.u32 %v305, 4294901760
        %v465 = vsub.f32 %v305, %v464
        %v466 = vand.u32 %v465, 4294901760
        %467 = vmatmul.f32.gmra.mxu0 %v466
        %v468 = vpop.f32.mrf.mxu0
        %v469 = vadd.f32 %v430, %v468
        %v470 = vand.u32 %v308, 4294901760
        %v471 = vsub.f32 %v308, %v470
        %v472 = vand.u32 %v471, 4294901760
        %473 = vmatmul.f32.gmra.mxu0 %v472
        %v474 = vpop.f32.mrf.mxu0
        %v475 = vadd.f32 %v435, %v474
        %v476 = vand.u32 %v311, 4294901760
        %v477 = vsub.f32 %v311, %v476
        %v478 = vand.u32 %v477, 4294901760
        %479 = vmatmul.f32.gmra.mxu0 %v478
        %v480 = vpop.f32.mrf.mxu0
        %v481 = vadd.f32 %v440, %v480
        %v482 = vand.u32 %v314, 4294901760
        %v483 = vsub.f32 %v314, %v482
        %v484 = vand.u32 %v483, 4294901760
        %485 = vmatmul.f32.gmra.mxu0 %v484
        %v486 = vpop.f32.mrf.mxu0
        %v487 = vadd.f32 %v445, %v486
        %488 = vdwg.mxu0
        %489 = vmatpush.msra.mxu0 0.0
        %490 = vmatpush.msra.mxu0 0.0
        %491 = vmatpush.msra.mxu0 0.0
        %492 = vmatpush.msra.mxu0 0.0
        %493 = vmatpush.msra.mxu0 0.0
        %494 = vmatpush.msra.mxu0 0.0
        %495 = vmatpush.msra.mxu0 0.0
        %496 = vmatpush.msra.mxu0 0.0
        %497 = vmatpush.msra.mxu0 0.0
        %498 = vmatpush.msra.mxu0 0.0
        %499 = vmatpush.msra.mxu0 0.0
        %500 = vmatpush.msra.mxu0 0.0
        %501 = vmatpush.msra.mxu0 0.0
        %502 = vmatpush.msra.mxu0 0.0
        %503 = vmatpush.msra.mxu0 0.0
        %v504 = vand.u32 %v318, 4294901760
        %v505 = vsub.f32 %v318, %v504
        %v506 = vand.u32 %v505, 4294901760
        %507 = vmatpush.msra.mxu0 %v506
        %v508 = vand.u32 %v305, 4294901760
        %509 = vmatmul.f32.gmra.mxu0 %v508
        %v510 = vpop.f32.mrf.mxu0
        %v511 = vadd.f32 %v469, %v510
        %v512 = vand.u32 %v308, 4294901760
        %513 = vmatmul.f32.gmra.mxu0 %v512
        %v514 = vpop.f32.mrf.mxu0
        %v515 = vadd.f32 %v475, %v514
        %v516 = vand.u32 %v311, 4294901760
        %517 = vmatmul.f32.gmra.mxu0 %v516
        %v518 = vpop.f32.mrf.mxu0
        %v519 = vadd.f32 %v481, %v518
        %v520 = vand.u32 %v314, 4294901760
        %521 = vmatmul.f32.gmra.mxu0 %v520
        %v522 = vpop.f32.mrf.mxu0
        %v523 = vadd.f32 %v487, %v522
        %524 = vdwg.mxu0
        %525 = vmatpush.msra.mxu0 0.0
        %526 = vmatpush.msra.mxu0 0.0
        %527 = vmatpush.msra.mxu0 0.0
        %528 = vmatpush.msra.mxu0 0.0
        %529 = vmatpush.msra.mxu0 0.0
        %530 = vmatpush.msra.mxu0 0.0
        %531 = vmatpush.msra.mxu0 0.0
        %532 = vmatpush.msra.mxu0 0.0
        %533 = vmatpush.msra.mxu0 0.0
        %534 = vmatpush.msra.mxu0 0.0
        %535 = vmatpush.msra.mxu0 0.0
        %536 = vmatpush.msra.mxu0 0.0
        %537 = vmatpush.msra.mxu0 0.0
        %538 = vmatpush.msra.mxu0 0.0
        %539 = vmatpush.msra.mxu0 0.0
        %v540 = vand.u32 %v318, 4294901760
        %541 = vmatpush.msra.mxu0 %v540
        %v542 = vand.u32 %v305, 4294901760
        %543 = vmatmul.f32.gmra.mxu0 %v542
        %v544 = vpop.f32.mrf.mxu0
        %v545 = vadd.f32 %v511, %v544
        %v546 = vand.u32 %v308, 4294901760
        %547 = vmatmul.f32.gmra.mxu0 %v546
        %v548 = vpop.f32.mrf.mxu0
        %v549 = vadd.f32 %v515, %v548
        %v550 = vand.u32 %v311, 4294901760
        %551 = vmatmul.f32.gmra.mxu0 %v550
        %v552 = vpop.f32.mrf.mxu0
        %v553 = vadd.f32 %v519, %v552
        %v554 = vand.u32 %v314, 4294901760
        %555 = vmatmul.f32.gmra.mxu0 %v554
        %v556 = vpop.f32.mrf.mxu0
        %v557 = vadd.f32 %v523, %v556
        %558 = vdwg.mxu0
        %v559 = vmax.f32 %v545, 0.0
        %v560 = vmax.f32 %v549, 0.0
        %v561 = vmax.f32 %v553, 0.0
        %v562 = vmax.f32 %v557, 0.0
        %v563 = vld [vmem:[%s3] sm:$0xff]
        %v564 = vld [vmem:[%s3 + $0x8] sm:$0xff]
        %v565 = vld [vmem:[%s3 + $0x10] sm:$0xff]
        %v566 = vld [vmem:[%s3 + $0x18] sm:$0x3f]
        %v567 = vld [vmem:[%s4] sm:$0xff]
        %v568 = vld [vmem:[%s4 + $0x8] sm:$0xff]
        %v569 = vld [vmem:[%s4 + $0x10] sm:$0xff]
        %v570 = vld [vmem:[%s4 + $0x18] sm:$0x3f]
        %572 = vset.pattern.permute.xlu0 0
        %573 = vperm.xlu0 %572, %v567
        %v574 = vpop.permute.xlu0 %573
        %577 = vset.pattern.permute.xlu0 0
        %578 = vperm.xlu0 %577, %v568
        %v579 = vpop.permute.xlu0 %578
        %582 = vset.pattern.permute.xlu0 0
        %583 = vperm.xlu0 %582, %v569
        %v584 = vpop.permute.xlu0 %583
        %587 = vset.pattern.permute.xlu0 0
        %588 = vperm.xlu0 %587, %v570
        %v589 = vpop.permute.xlu0 %588
        %vm591 = vcmask 244736
        %v593 = vsel %vm591, %v563, 0
        %v596 = vsel %vm591, %v564, 0
        %v599 = vsel %vm591, %v565, 0
        %v602 = vsel %vm591, %v566, 0
        %vm604 = vcmask 1045504
        %v606 = vsel %vm604, %v562, 0
        %608 = vmatpush.msra.mxu0 0.0
        %609 = vmatpush.msra.mxu0 0.0
        %610 = vmatpush.msra.mxu0 0.0
        %611 = vmatpush.msra.mxu0 0.0
        %612 = vmatpush.msra.mxu0 0.0
        %613 = vmatpush.msra.mxu0 0.0
        %614 = vmatpush.msra.mxu0 0.0
        %615 = vmatpush.msra.mxu0 0.0
        %616 = vmatpush.msra.mxu0 0.0
        %617 = vmatpush.msra.mxu0 0.0
        %618 = vmatpush.msra.mxu0 0.0
        %619 = vmatpush.msra.mxu0 0.0
        %v620 = vand.u32 %v606, 4294901760
        %621 = vmatpush.msra.mxu0 %v620
        %v622 = vand.u32 %v561, 4294901760
        %623 = vmatpush.msra.mxu0 %v622
        %v624 = vand.u32 %v560, 4294901760
        %625 = vmatpush.msra.mxu0 %v624
        %v626 = vand.u32 %v559, 4294901760
        %627 = vmatpush.msra.mxu0 %v626
        %v628 = vand.u32 %v593, 4294901760
        %v629 = vsub.f32 %v593, %v628
        %v630 = vand.u32 %v629, 4294901760
        %v631 = vsub.f32 %v629, %v630
        %v632 = vand.u32 %v631, 4294901760
        %633 = vmatmul.f32.gmra.mxu0 %v632
        %v634 = vpop.f32.mrf.mxu0
        %v635 = vadd.f32 %v574, %v634
        %v636 = vand.u32 %v596, 4294901760
        %v637 = vsub.f32 %v596, %v636
        %v638 = vand.u32 %v637, 4294901760
        %v639 = vsub.f32 %v637, %v638
        %v640 = vand.u32 %v639, 4294901760
        %641 = vmatmul.f32.gmra.mxu0 %v640
        %v642 = vpop.f32.mrf.mxu0
        %v643 = vadd.f32 %v579, %v642
        %v644 = vand.u32 %v599, 4294901760
        %v645 = vsub.f32 %v599, %v644
        %v646 = vand.u32 %v645, 4294901760
        %v647 = vsub.f32 %v645, %v646
        %v648 = vand.u32 %v647, 4294901760
        %649 = vmatmul.f32.gmra.mxu0 %v648
        %v650 = vpop.f32.mrf.mxu0
        %v651 = vadd.f32 %v584, %v650
        %v652 = vand.u32 %v602, 4294901760
        %v653 = vsub.f32 %v602, %v652
        %v654 = vand.u32 %v653, 4294901760
        %v655 = vsub.f32 %v653, %v654
        %v656 = vand.u32 %v655, 4294901760
        %657 = vmatmul.f32.gmra.mxu0 %v656
        %v658 = vpop.f32.mrf.mxu0
        %v659 = vadd.f32 %v589, %v658
        %660 = vdwg.mxu0
        %661 = vmatpush.msra.mxu0 0.0
        %662 = vmatpush.msra.mxu0 0.0
        %663 = vmatpush.msra.mxu0 0.0
        %664 = vmatpush.msra.mxu0 0.0
        %665 = vmatpush.msra.mxu0 0.0
        %666 = vmatpush.msra.mxu0 0.0
        %667 = vmatpush.msra.mxu0 0.0
        %668 = vmatpush.msra.mxu0 0.0
        %669 = vmatpush.msra.mxu0 0.0
        %670 = vmatpush.msra.mxu0 0.0
        %671 = vmatpush.msra.mxu0 0.0
        %672 = vmatpush.msra.mxu0 0.0
        %v673 = vand.u32 %v606, 4294901760
        %v674 = vsub.f32 %v606, %v673
        %v675 = vand.u32 %v674, 4294901760
        %v676 = vsub.f32 %v674, %v675
        %v677 = vand.u32 %v676, 4294901760
        %678 = vmatpush.msra.mxu0 %v677
        %v679 = vand.u32 %v561, 4294901760
        %v680 = vsub.f32 %v561, %v679
        %v681 = vand.u32 %v680, 4294901760
        %v682 = vsub.f32 %v680, %v681
        %v683 = vand.u32 %v682, 4294901760
        %684 = vmatpush.msra.mxu0 %v683
        %v685 = vand.u32 %v560, 4294901760
        %v686 = vsub.f32 %v560, %v685
        %v687 = vand.u32 %v686, 4294901760
        %v688 = vsub.f32 %v686, %v687
        %v689 = vand.u32 %v688, 4294901760
        %690 = vmatpush.msra.mxu0 %v689
        %v691 = vand.u32 %v559, 4294901760
        %v692 = vsub.f32 %v559, %v691
        %v693 = vand.u32 %v692, 4294901760
        %v694 = vsub.f32 %v692, %v693
        %v695 = vand.u32 %v694, 4294901760
        %696 = vmatpush.msra.mxu0 %v695
        %v697 = vand.u32 %v593, 4294901760
        %698 = vmatmul.f32.gmra.mxu0 %v697
        %v699 = vpop.f32.mrf.mxu0
        %v700 = vadd.f32 %v635, %v699
        %v701 = vand.u32 %v596, 4294901760
        %702 = vmatmul.f32.gmra.mxu0 %v701
        %v703 = vpop.f32.mrf.mxu0
        %v704 = vadd.f32 %v643, %v703
        %v705 = vand.u32 %v599, 4294901760
        %706 = vmatmul.f32.gmra.mxu0 %v705
        %v707 = vpop.f32.mrf.mxu0
        %v708 = vadd.f32 %v651, %v707
        %v709 = vand.u32 %v602, 4294901760
        %710 = vmatmul.f32.gmra.mxu0 %v709
        %v711 = vpop.f32.mrf.mxu0
        %v712 = vadd.f32 %v659, %v711
        %713 = vdwg.mxu0
        %714 = vmatpush.msra.mxu0 0.0
        %715 = vmatpush.msra.mxu0 0.0
        %716 = vmatpush.msra.mxu0 0.0
        %717 = vmatpush.msra.mxu0 0.0
        %718 = vmatpush.msra.mxu0 0.0
        %719 = vmatpush.msra.mxu0 0.0
        %720 = vmatpush.msra.mxu0 0.0
        %721 = vmatpush.msra.mxu0 0.0
        %722 = vmatpush.msra.mxu0 0.0
        %723 = vmatpush.msra.mxu0 0.0
        %724 = vmatpush.msra.mxu0 0.0
        %725 = vmatpush.msra.mxu0 0.0
        %v726 = vand.u32 %v606, 4294901760
        %v727 = vsub.f32 %v606, %v726
        %728 = vmatpush.msra.mxu0 %v727
        %v729 = vand.u32 %v561, 4294901760
        %v730 = vsub.f32 %v561, %v729
        %731 = vmatpush.msra.mxu0 %v730
        %v732 = vand.u32 %v560, 4294901760
        %v733 = vsub.f32 %v560, %v732
        %734 = vmatpush.msra.mxu0 %v733
        %v735 = vand.u32 %v559, 4294901760
        %v736 = vsub.f32 %v559, %v735
        %737 = vmatpush.msra.mxu0 %v736
        %v738 = vand.u32 %v593, 4294901760
        %v739 = vsub.f32 %v593, %v738
        %740 = vmatmul.f32.gmra.mxu0 %v739
        %v741 = vpop.f32.mrf.mxu0
        %v742 = vadd.f32 %v700, %v741
        %v743 = vand.u32 %v596, 4294901760
        %v744 = vsub.f32 %v596, %v743
        %745 = vmatmul.f32.gmra.mxu0 %v744
        %v746 = vpop.f32.mrf.mxu0
        %v747 = vadd.f32 %v704, %v746
        %v748 = vand.u32 %v599, 4294901760
        %v749 = vsub.f32 %v599, %v748
        %750 = vmatmul.f32.gmra.mxu0 %v749
        %v751 = vpop.f32.mrf.mxu0
        %v752 = vadd.f32 %v708, %v751
        %v753 = vand.u32 %v602, 4294901760
        %v754 = vsub.f32 %v602, %v753
        %755 = vmatmul.f32.gmra.mxu0 %v754
        %v756 = vpop.f32.mrf.mxu0
        %v757 = vadd.f32 %v712, %v756
        %758 = vdwg.mxu0
        %759 = vmatpush.msra.mxu0 0.0
        %760 = vmatpush.msra.mxu0 0.0
        %761 = vmatpush.msra.mxu0 0.0
        %762 = vmatpush.msra.mxu0 0.0
        %763 = vmatpush.msra.mxu0 0.0
        %764 = vmatpush.msra.mxu0 0.0
        %765 = vmatpush.msra.mxu0 0.0
        %766 = vmatpush.msra.mxu0 0.0
        %767 = vmatpush.msra.mxu0 0.0
        %768 = vmatpush.msra.mxu0 0.0
        %769 = vmatpush.msra.mxu0 0.0
        %770 = vmatpush.msra.mxu0 0.0
        %v771 = vand.u32 %v606, 4294901760
        %772 = vmatpush.msra.mxu0 %v771
        %v773 = vand.u32 %v561, 4294901760
        %774 = vmatpush.msra.mxu0 %v773
        %v775 = vand.u32 %v560, 4294901760
        %776 = vmatpush.msra.mxu0 %v775
        %v777 = vand.u32 %v559, 4294901760
        %778 = vmatpush.msra.mxu0 %v777
        %v779 = vand.u32 %v593, 4294901760
        %v780 = vsub.f32 %v593, %v779
        %v781 = vand.u32 %v780, 4294901760
        %782 = vmatmul.f32.gmra.mxu0 %v781
        %v783 = vpop.f32.mrf.mxu0
        %v784 = vadd.f32 %v742, %v783
        %v785 = vand.u32 %v596, 4294901760
        %v786 = vsub.f32 %v596, %v785
        %v787 = vand.u32 %v786, 4294901760
        %788 = vmatmul.f32.gmra.mxu0 %v787
        %v789 = vpop.f32.mrf.mxu0
        %v790 = vadd.f32 %v747, %v789
        %v791 = vand.u32 %v599, 4294901760
        %v792 = vsub.f32 %v599, %v791
        %v793 = vand.u32 %v792, 4294901760
        %794 = vmatmul.f32.gmra.mxu0 %v793
        %v795 = vpop.f32.mrf.mxu0
        %v796 = vadd.f32 %v752, %v795
        %v797 = vand.u32 %v602, 4294901760
        %v798 = vsub.f32 %v602, %v797
        %v799 = vand.u32 %v798, 4294901760
        %800 = vmatmul.f32.gmra.mxu0 %v799
        %v801 = vpop.f32.mrf.mxu0
        %v802 = vadd.f32 %v757, %v801
        %803 = vdwg.mxu0
        %804 = vmatpush.msra.mxu0 0.0
        %805 = vmatpush.msra.mxu0 0.0
        %806 = vmatpush.msra.mxu0 0.0
        %807 = vmatpush.msra.mxu0 0.0
        %808 = vmatpush.msra.mxu0 0.0
        %809 = vmatpush.msra.mxu0 0.0
        %810 = vmatpush.msra.mxu0 0.0
        %811 = vmatpush.msra.mxu0 0.0
        %812 = vmatpush.msra.mxu0 0.0
        %813 = vmatpush.msra.mxu0 0.0
        %814 = vmatpush.msra.mxu0 0.0
        %815 = vmatpush.msra.mxu0 0.0
        %v816 = vand.u32 %v606, 4294901760
        %v817 = vsub.f32 %v606, %v816
        %v818 = vand.u32 %v817, 4294901760
        %819 = vmatpush.msra.mxu0 %v818
        %v820 = vand.u32 %v561, 4294901760
        %v821 = vsub.f32 %v561, %v820
        %v822 = vand.u32 %v821, 4294901760
        %823 = vmatpush.msra.mxu0 %v822
        %v824 = vand.u32 %v560, 4294901760
        %v825 = vsub.f32 %v560, %v824
        %v826 = vand.u32 %v825, 4294901760
        %827 = vmatpush.msra.mxu0 %v826
        %v828 = vand.u32 %v559, 4294901760
        %v829 = vsub.f32 %v559, %v828
        %v830 = vand.u32 %v829, 4294901760
        %831 = vmatpush.msra.mxu0 %v830
        %v832 = vand.u32 %v593, 4294901760
        %833 = vmatmul.f32.gmra.mxu0 %v832
        %v834 = vpop.f32.mrf.mxu0
        %v835 = vadd.f32 %v784, %v834
        %v836 = vand.u32 %v596, 4294901760
        %837 = vmatmul.f32.gmra.mxu0 %v836
        %v838 = vpop.f32.mrf.mxu0
        %v839 = vadd.f32 %v790, %v838
        %v840 = vand.u32 %v599, 4294901760
        %841 = vmatmul.f32.gmra.mxu0 %v840
        %v842 = vpop.f32.mrf.mxu0
        %v843 = vadd.f32 %v796, %v842
        %v844 = vand.u32 %v602, 4294901760
        %845 = vmatmul.f32.gmra.mxu0 %v844
        %v846 = vpop.f32.mrf.mxu0
        %v847 = vadd.f32 %v802, %v846
        %848 = vdwg.mxu0
        %849 = vmatpush.msra.mxu0 0.0
        %850 = vmatpush.msra.mxu0 0.0
        %851 = vmatpush.msra.mxu0 0.0
        %852 = vmatpush.msra.mxu0 0.0
        %853 = vmatpush.msra.mxu0 0.0
        %854 = vmatpush.msra.mxu0 0.0
        %855 = vmatpush.msra.mxu0 0.0
        %856 = vmatpush.msra.mxu0 0.0
        %857 = vmatpush.msra.mxu0 0.0
        %858 = vmatpush.msra.mxu0 0.0
        %859 = vmatpush.msra.mxu0 0.0
        %860 = vmatpush.msra.mxu0 0.0
        %v861 = vand.u32 %v606, 4294901760
        %862 = vmatpush.msra.mxu0 %v861
        %v863 = vand.u32 %v561, 4294901760
        %864 = vmatpush.msra.mxu0 %v863
        %v865 = vand.u32 %v560, 4294901760
        %866 = vmatpush.msra.mxu0 %v865
        %v867 = vand.u32 %v559, 4294901760
        %868 = vmatpush.msra.mxu0 %v867
        %v869 = vand.u32 %v593, 4294901760
        %870 = vmatmul.f32.gmra.mxu0 %v869
        %v871 = vpop.f32.mrf.mxu0
        %v872 = vadd.f32 %v835, %v871
        %v873 = vand.u32 %v596, 4294901760
        %874 = vmatmul.f32.gmra.mxu0 %v873
        %v875 = vpop.f32.mrf.mxu0
        %v876 = vadd.f32 %v839, %v875
        %v877 = vand.u32 %v599, 4294901760
        %878 = vmatmul.f32.gmra.mxu0 %v877
        %v879 = vpop.f32.mrf.mxu0
        %v880 = vadd.f32 %v843, %v879
        %v881 = vand.u32 %v602, 4294901760
        %882 = vmatmul.f32.gmra.mxu0 %v881
        %v883 = vpop.f32.mrf.mxu0
        %v884 = vadd.f32 %v847, %v883
        %885 = vdwg.mxu0
        %v886 = vmax.f32 %v872, 0.0
        %v887 = vmax.f32 %v876, 0.0
        %v888 = vmax.f32 %v880, 0.0
        %v889 = vmax.f32 %v884, 0.0
        %v890 = vld [vmem:[%s5] sm:$0x7f]
        %v891 = vld [vmem:[%s6] sm:$0x7f]
        %893 = vset.pattern.permute.xlu0 0
        %894 = vperm.xlu0 %893, %v891
        %v895 = vpop.permute.xlu0 %894
        %v898 = vsel %vm591, %v890, 0
        %v901 = vsel %vm604, %v889, 0
        %903 = vmatpush.msra.mxu0 0.0
        %904 = vmatpush.msra.mxu0 0.0
        %905 = vmatpush.msra.mxu0 0.0
        %906 = vmatpush.msra.mxu0 0.0
        %907 = vmatpush.msra.mxu0 0.0
        %908 = vmatpush.msra.mxu0 0.0
        %909 = vmatpush.msra.mxu0 0.0
        %910 = vmatpush.msra.mxu0 0.0
        %911 = vmatpush.msra.mxu0 0.0
        %912 = vmatpush.msra.mxu0 0.0
        %913 = vmatpush.msra.mxu0 0.0
        %914 = vmatpush.msra.mxu0 0.0
        %v915 = vand.u32 %v901, 4294901760
        %916 = vmatpush.msra.mxu0 %v915
        %v917 = vand.u32 %v888, 4294901760
        %918 = vmatpush.msra.mxu0 %v917
        %v919 = vand.u32 %v887, 4294901760
        %920 = vmatpush.msra.mxu0 %v919
        %v921 = vand.u32 %v886, 4294901760
        %922 = vmatpush.msra.mxu0 %v921
        %v923 = vand.u32 %v898, 4294901760
        %v924 = vsub.f32 %v898, %v923
        %v925 = vand.u32 %v924, 4294901760
        %v926 = vsub.f32 %v924, %v925
        %v927 = vand.u32 %v926, 4294901760
        %928 = vmatmul.f32.gmra.mxu0 %v927
        %v929 = vpop.f32.mrf.mxu0
        %v930 = vadd.f32 %v895, %v929
        %931 = vdwg.mxu0
        %932 = vmatpush.msra.mxu0 0.0
        %933 = vmatpush.msra.mxu0 0.0
        %934 = vmatpush.msra.mxu0 0.0
        %935 = vmatpush.msra.mxu0 0.0
        %936 = vmatpush.msra.mxu0 0.0
        %937 = vmatpush.msra.mxu0 0.0
        %938 = vmatpush.msra.mxu0 0.0
        %939 = vmatpush.msra.mxu0 0.0
        %940 = vmatpush.msra.mxu0 0.0
        %941 = vmatpush.msra.mxu0 0.0
        %942 = vmatpush.msra.mxu0 0.0
        %943 = vmatpush.msra.mxu0 0.0
        %v944 = vand.u32 %v901, 4294901760
        %v945 = vsub.f32 %v901, %v944
        %v946 = vand.u32 %v945, 4294901760
        %v947 = vsub.f32 %v945, %v946
        %v948 = vand.u32 %v947, 4294901760
        %949 = vmatpush.msra.mxu0 %v948
        %v950 = vand.u32 %v888, 4294901760
        %v951 = vsub.f32 %v888, %v950
        %v952 = vand.u32 %v951, 4294901760
        %v953 = vsub.f32 %v951, %v952
        %v954 = vand.u32 %v953, 4294901760
        %955 = vmatpush.msra.mxu0 %v954
        %v956 = vand.u32 %v887, 4294901760
        %v957 = vsub.f32 %v887, %v956
        %v958 = vand.u32 %v957, 4294901760
        %v959 = vsub.f32 %v957, %v958
        %v960 = vand.u32 %v959, 4294901760
        %961 = vmatpush.msra.mxu0 %v960
        %v962 = vand.u32 %v886, 4294901760
        %v963 = vsub.f32 %v886, %v962
        %v964 = vand.u32 %v963, 4294901760
        %v965 = vsub.f32 %v963, %v964
        %v966 = vand.u32 %v965, 4294901760
        %967 = vmatpush.msra.mxu0 %v966
        %v968 = vand.u32 %v898, 4294901760
        %969 = vmatmul.f32.gmra.mxu0 %v968
        %v970 = vpop.f32.mrf.mxu0
        %v971 = vadd.f32 %v930, %v970
        %972 = vdwg.mxu0
        %973 = vmatpush.msra.mxu0 0.0
        %974 = vmatpush.msra.mxu0 0.0
        %975 = vmatpush.msra.mxu0 0.0
        %976 = vmatpush.msra.mxu0 0.0
        %977 = vmatpush.msra.mxu0 0.0
        %978 = vmatpush.msra.mxu0 0.0
        %979 = vmatpush.msra.mxu0 0.0
        %980 = vmatpush.msra.mxu0 0.0
        %981 = vmatpush.msra.mxu0 0.0
        %982 = vmatpush.msra.mxu0 0.0
        %983 = vmatpush.msra.mxu0 0.0
        %984 = vmatpush.msra.mxu0 0.0
        %v985 = vand.u32 %v901, 4294901760
        %v986 = vsub.f32 %v901, %v985
        %987 = vmatpush.msra.mxu0 %v986
        %v988 = vand.u32 %v888, 4294901760
        %v989 = vsub.f32 %v888, %v988
        %990 = vmatpush.msra.mxu0 %v989
        %v991 = vand.u32 %v887, 4294901760
        %v992 = vsub.f32 %v887, %v991
        %993 = vmatpush.msra.mxu0 %v992
        %v994 = vand.u32 %v886, 4294901760
        %v995 = vsub.f32 %v886, %v994
        %996 = vmatpush.msra.mxu0 %v995
        %v997 = vand.u32 %v898, 4294901760
        %v998 = vsub.f32 %v898, %v997
        %999 = vmatmul.f32.gmra.mxu0 %v998
        %v1000 = vpop.f32.mrf.mxu0
        %v1001 = vadd.f32 %v971, %v1000
        %1002 = vdwg.mxu0
        %1003 = vmatpush.msra.mxu0 0.0
        %1004 = vmatpush.msra.mxu0 0.0
        %1005 = vmatpush.msra.mxu0 0.0
        %1006 = vmatpush.msra.mxu0 0.0
        %1007 = vmatpush.msra.mxu0 0.0
        %1008 = vmatpush.msra.mxu0 0.0
        %1009 = vmatpush.msra.mxu0 0.0
        %1010 = vmatpush.msra.mxu0 0.0
        %1011 = vmatpush.msra.mxu0 0.0
        %1012 = vmatpush.msra.mxu0 0.0
        %1013 = vmatpush.msra.mxu0 0.0
        %1014 = vmatpush.msra.mxu0 0.0
        %v1015 = vand.u32 %v901, 4294901760
        %1016 = vmatpush.msra.mxu0 %v1015
        %v1017 = vand.u32 %v888, 4294901760
        %1018 = vmatpush.msra.mxu0 %v1017
        %v1019 = vand.u32 %v887, 4294901760
        %1020 = vmatpush.msra.mxu0 %v1019
        %v1021 = vand.u32 %v886, 4294901760
        %1022 = vmatpush.msra.mxu0 %v1021
        %v1023 = vand.u32 %v898, 4294901760
        %v1024 = vsub.f32 %v898, %v1023
        %v1025 = vand.u32 %v1024, 4294901760
        %1026 = vmatmul.f32.gmra.mxu0 %v1025
        %v1027 = vpop.f32.mrf.mxu0
        %v1028 = vadd.f32 %v1001, %v1027
        %1029 = vdwg.mxu0
        %1030 = vmatpush.msra.mxu0 0.0
        %1031 = vmatpush.msra.mxu0 0.0
        %1032 = vmatpush.msra.mxu0 0.0
        %1033 = vmatpush.msra.mxu0 0.0
        %1034 = vmatpush.msra.mxu0 0.0
        %1035 = vmatpush.msra.mxu0 0.0
        %1036 = vmatpush.msra.mxu0 0.0
        %1037 = vmatpush.msra.mxu0 0.0
        %1038 = vmatpush.msra.mxu0 0.0
        %1039 = vmatpush.msra.mxu0 0.0
        %1040 = vmatpush.msra.mxu0 0.0
        %1041 = vmatpush.msra.mxu0 0.0
        %v1042 = vand.u32 %v901, 4294901760
        %v1043 = vsub.f32 %v901, %v1042
        %v1044 = vand.u32 %v1043, 4294901760
        %1045 = vmatpush.msra.mxu0 %v1044
        %v1046 = vand.u32 %v888, 4294901760
        %v1047 = vsub.f32 %v888, %v1046
        %v1048 = vand.u32 %v1047, 4294901760
        %1049 = vmatpush.msra.mxu0 %v1048
        %v1050 = vand.u32 %v887, 4294901760
        %v1051 = vsub.f32 %v887, %v1050
        %v1052 = vand.u32 %v1051, 4294901760
        %1053 = vmatpush.msra.mxu0 %v1052
        %v1054 = vand.u32 %v886, 4294901760
        %v1055 = vsub.f32 %v886, %v1054
        %v1056 = vand.u32 %v1055, 4294901760
        %1057 = vmatpush.msra.mxu0 %v1056
        %v1058 = vand.u32 %v898, 4294901760
        %1059 = vmatmul.f32.gmra.mxu0 %v1058
        %v1060 = vpop.f32.mrf.mxu0
        %v1061 = vadd.f32 %v1028, %v1060
        %1062 = vdwg.mxu0
        %1063 = vmatpush.msra.mxu0 0.0
        %1064 = vmatpush.msra.mxu0 0.0
        %1065 = vmatpush.msra.mxu0 0.0
        %1066 = vmatpush.msra.mxu0 0.0
        %1067 = vmatpush.msra.mxu0 0.0
        %1068 = vmatpush.msra.mxu0 0.0
        %1069 = vmatpush.msra.mxu0 0.0
        %1070 = vmatpush.msra.mxu0 0.0
        %1071 = vmatpush.msra.mxu0 0.0
        %1072 = vmatpush.msra.mxu0 0.0
        %1073 = vmatpush.msra.mxu0 0.0
        %1074 = vmatpush.msra.mxu0 0.0
        %v1075 = vand.u32 %v901, 4294901760
        %1076 = vmatpush.msra.mxu0 %v1075
        %v1077 = vand.u32 %v888, 4294901760
        %1078 = vmatpush.msra.mxu0 %v1077
        %v1079 = vand.u32 %v887, 4294901760
        %1080 = vmatpush.msra.mxu0 %v1079
        %v1081 = vand.u32 %v886, 4294901760
        %1082 = vmatpush.msra.mxu0 %v1081
        %v1083 = vand.u32 %v898, 4294901760
        %1084 = vmatmul.f32.gmra.mxu0 %v1083
        %v1085 = vpop.f32.mrf.mxu0
        %v1086 = vadd.f32 %v1061, %v1085
        %1087 = vdwg.mxu0
        %v1088 = vtanh.pop %v1086
        %v1089 = vmul.f32 %v1088, 0.1
        %vm1090 = vcmask 1042432
        %v1091 = vsel %vm1090, %v1089, 0.0
        %v1092 = vrot.slane %v1091, 4
        %v1093 = vadd.f32 %v1091, %v1092
        %v1094 = vrot.slane %v1093, 2
        %v1095 = vadd.f32 %v1093, %v1094
        %v1096 = vrot.slane %v1095, 1
        %v1097 = vadd.f32 %v1095, %v1096
        %v1098 = vsub.f32 0.0, %v1097
        %v1099 = vld [vmem:[%s273 + $0x4] sm:$0x7]
        %v1100 = vmul.f32 %v1089, 1.442695
        %v1101 = vpow.pop %v1100
        %v1102 = vmul.f32 %v1099, %v1101
        %v1104 = vrot.slane %v1086, 3
        %v1106 = vadd.f32 %v1102, %v1104
        %1107 = vst [vmem:[%s269] sm:$0x7] %v1106
        %v1108 = vld [vmem:[%s273 + $0x7] sm:$0x1]
        %v1109 = vmul.f32 %v1098, 1.442695
        %v1110 = vpow.pop %v1109
        %v1111 = vmul.f32 %v1108, %v1110
        %v1112 = vrot.slane %v1086, 6
        %v1114 = vadd.f32 %v1111, %v1112
        %1115 = vst [vmem:[%s269 + $0x3] sm:$0x1] %v1114
        %1116 = vst [vmem:[%s269 + $0x4] sm:$0xf] %v274
        %s1117 = sand.u32 %s181, 1
        %s1118 = scalar_lea.sflag [#allocation3], %s1117
        %s1119 = sand.u32 %s181, 1
        %s1120 = smul.addr %s1119, 8
        %s1121 = scalar_lea.vmem [#allocation2], %s1120
        // Predicated region
        $region49: #{tpu_custom_call.1} parent=47 // pred_check
          %p1122 = pneg %p191
        $region50: #{tpu_custom_call.1} parent=47 // pred_check_branch
          %1124 = sbr.rel (%p1122) target = $region52
        $region51: #{tpu_custom_call.1} parent=47 // pred_region
          %1126 = vsyncadd %s1118, 0
          %s1127 = smul.addr %s21, 8
          %s1128 = scalar_lea.hbm %s7, %s1127
          %s1130 = sshll.u32 %s1121, 4
          %s1131 = int_to_ptr.vmem [resolvable:$true] %s1130
          %s1132 = sshll.u32 %s1128, 4
          %s1133 = int_to_ptr.hbm [resolvable:$true] %s1132
          %1135 = dma.vmem_to_hbm [thread:$0]  %s1131, 128, %s1133, %s1118
        $region52: #{tpu_custom_call.1} parent=47 // pred_fallthru
          _
      $region48: #{tpu_custom_call.1} parent=5 // pred_fallthru
        _
      %p1136 = scmp.le.s32.totalorder 2, %s16
      // Predicated region
      $region53: #{tpu_custom_call.1} parent=5 // pred_check
        %p1137 = pneg %p1136
      $region54: #{tpu_custom_call.1} parent=5 // pred_check_branch
        %1139 = sbr.rel (%p1137) target = $region56
      $region55: #{tpu_custom_call.1} parent=5 // pred_region
        %s1140 = ssub.s32 %s16, 2
        // Predicated region
        $region57: #{tpu_custom_call.1} parent=55 // pred_check
          %p1141 = pneg %p197
        $region58: #{tpu_custom_call.1} parent=55 // pred_check_branch
          %1143 = sbr.rel (%p1141) target = $region60
        $region59: #{tpu_custom_call.1} parent=55 // pred_region
          %s1144 = sand.u32 %s182, 1
          %s1145 = scalar_lea.sflag [#allocation3], %s1144
          %s1146 = sand.u32 %s182, 1
          %s1147 = smul.addr %s1146, 8
          %s1148 = scalar_lea.vmem [#allocation2], %s1147
          %1150 = dma.done %s1145, 128
        $region60: #{tpu_custom_call.1} parent=55 // pred_fallthru
          _
      $region56: #{tpu_custom_call.1} parent=5 // pred_fallthru
        _
    $region6: #{tpu_custom_call.1} parent=1 // loop_footer
      %s20 = sadd.s32 1, %s16
    $region7: #{tpu_custom_call.1} parent=1 // loop_footer_branch
      %15 = sbr.rel target = $region3
    $region8: #{tpu_custom_call.1} parent=1 // loop_exit
      _
    %1151 = vsyncpa [#allocation3], 1
    %s1152 = scalar_lea.sflag [#allocation3], 1
    %1153 = vsyncpa %s1152, 1

</llo_original>
